<compile_context>
chip_gen: v7x
topology: tpu7x:2x2x1
jax: 0.10.0
libtpu: 0.0.40
codegen_flags: <defaults>
</compile_context>

<pallas_src>
import functools

import jax
import jax.numpy as jnp
from jax import lax
from jax.experimental import pallas as pl
from jax.experimental.pallas import tpu as pltpu


# ----------------------------------------------------------------------------
# Recurrent multi-layer LSTM kernel.
#   xg_ref   : (T, 4, Bp, H) f32   precomputed layer-0 gate pre-activations
#                                  (x_t @ W_ih_0 + b_ih_0 + b_hh_0), gate-major
#   whh0_ref : (4, H, H)      bf16 layer-0 recurrent weights (per gate)
#   wcat_ref : (Lu, 4, 2H, H) bf16 layers>=1 fused [W_ih; W_hh] (per gate)
#   bup_ref  : (Lu, 4, 1, H)  f32  layers>=1 combined biases (per gate)
#   hout_ref : (T, Bp, H)     f32  top-layer hidden states (FC applied later)
#   h_ref/c_ref : (L, Bp, H)  f32  VMEM state scratch
# Gate order follows PyTorch: i, f, g, o.
# ----------------------------------------------------------------------------
def _lstm_recurrent_kernel(xg_ref, whh0_ref, wcat_ref, bup_ref, hout_ref,
                           h_ref, c_ref, *, num_layers, seq_len):
    L, T = num_layers, seq_len

    h_ref[...] = jnp.zeros_like(h_ref)
    c_ref[...] = jnp.zeros_like(c_ref)

    # TODO(synk): nn.LSTM inter-layer dropout (p=0.5) is training-only; this
    # kernel implements eval-mode semantics (no dropout).
    def step(t, carry):
        xg_t = xg_ref[t]  # (4, Bp, H) f32, dynamic index on leading axis
        inp = None
        for l in range(L):
            h_prev = h_ref[l]  # (Bp, H) f32
            c_prev = c_ref[l]
            if l == 0:
                # Input contribution + bias already folded into xg_t.
                lhs = h_prev.astype(jnp.bfloat16)
                gates = [
                    xg_t[k] + jnp.dot(lhs, whh0_ref[k],
                                      preferred_element_type=jnp.float32)
                    for k in range(4)
                ]
            else:
                # Fused input/recurrent matmul: [h_{l-1}; h_l] @ [W_ih; W_hh].
                lhs = jnp.concatenate([inp, h_prev],
                                      axis=-1).astype(jnp.bfloat16)
                gates = [
                    bup_ref[l - 1, k]
                    + jnp.dot(lhs, wcat_ref[l - 1, k],
                              preferred_element_type=jnp.float32)
                    for k in range(4)
                ]
            i_g = jax.nn.sigmoid(gates[0])
            f_g = jax.nn.sigmoid(gates[1])
            g_g = jnp.tanh(gates[2])
            o_g = jax.nn.sigmoid(gates[3])
            c_new = f_g * c_prev + i_g * g_g
            h_new = o_g * jnp.tanh(c_new)
            c_ref[l] = c_new
            h_ref[l] = h_new
            inp = h_new
        hout_ref[t] = inp  # top-layer hidden state for this step
        return carry

    lax.fori_loop(0, T, step, 0)


def lstm_recurrence(xg, whh0, wcat, bup, *, num_layers, hidden_size, seq_len,
                    batch_pad):
    T, Bp, H, L = seq_len, batch_pad, hidden_size, num_layers
    Lu = wcat.shape[0]  # max(L - 1, 1)
    kernel = functools.partial(
        _lstm_recurrent_kernel, num_layers=L, seq_len=T)
    # TODO(synk): for long sequences / large H, chunk T over a grid axis and
    # add a parallel batch grid axis so v7x's second TensorCore is used.
    return pl.pallas_call(
        kernel,
        out_shape=jax.ShapeDtypeStruct((T, Bp, H), jnp.float32),
        grid_spec=pltpu.PrefetchScalarGridSpec(
            num_scalar_prefetch=0,
            grid=(1,),
            in_specs=[
                pl.BlockSpec((T, 4, Bp, H), lambda i: (0, 0, 0, 0)),
                pl.BlockSpec((4, H, H), lambda i: (0, 0, 0)),
                pl.BlockSpec((Lu, 4, 2 * H, H), lambda i: (0, 0, 0, 0)),
                pl.BlockSpec((Lu, 4, 1, H), lambda i: (0, 0, 0, 0)),
            ],
            out_specs=pl.BlockSpec((T, Bp, H), lambda i: (0, 0, 0)),
            scratch_shapes=[
                pltpu.VMEM((L, Bp, H), jnp.float32),  # h state
                pltpu.VMEM((L, Bp, H), jnp.float32),  # c state
            ],
        ),
        compiler_params=pltpu.CompilerParams(
            dimension_semantics=("arbitrary",)),
    )(xg, whh0, wcat, bup)


# ----------------------------------------------------------------------------
# Hoisted output projection: (T*Bp, H) @ (H, V) + b, tiled over V.
# ----------------------------------------------------------------------------
def _fc_kernel(h_ref, w_ref, b_ref, o_ref):
    o_ref[...] = (
        jnp.dot(h_ref[...], w_ref[...], preferred_element_type=jnp.float32)
        + b_ref[...]
    ).astype(o_ref.dtype)


def fc_proj(h_flat_bf16, w_bf16, b_f32, *, tile_n=128):
    M, H = h_flat_bf16.shape
    V = w_bf16.shape[1]
    tn = tile_n if V % tile_n == 0 else V
    return pl.pallas_call(
        _fc_kernel,
        out_shape=jax.ShapeDtypeStruct((M, V), jnp.float32),
        grid_spec=pltpu.PrefetchScalarGridSpec(
            num_scalar_prefetch=0,
            grid=(V // tn,),
            in_specs=[
                pl.BlockSpec((M, H), lambda j: (0, 0)),
                pl.BlockSpec((H, tn), lambda j: (0, j)),
                pl.BlockSpec((1, tn), lambda j: (0, j)),
            ],
            out_specs=pl.BlockSpec((M, tn), lambda j: (0, j)),
        ),
        compiler_params=pltpu.CompilerParams(
            dimension_semantics=("parallel",)),
    )(h_flat_bf16, w_bf16, b_f32)


# ----------------------------------------------------------------------------
# Parameter construction (mirrors the PyTorch module, gate-major layout).
# ----------------------------------------------------------------------------
def init_params(key, input_size, hidden_size, num_layers, vocab_size):
    H, V, L = hidden_size, vocab_size, num_layers
    keys = jax.random.split(key, 5 + 4 * L)
    scale = 1.0 / (H ** 0.5)

    def u(k, shape):
        return jax.random.uniform(k, shape, jnp.float32, -scale, scale)

    params = {}
    # nn.Embedding default init is N(0, 1).
    params["embedding"] = jax.random.normal(keys[0], (V, H), jnp.float32)
    params["proj_w_t"] = u(keys[1], (input_size, H))
    params["proj_b"] = u(keys[2], (1, H))

    # Per-layer LSTM weights, gate-major (gate order i, f, g, o), stored
    # transposed for right-multiplication: gate = act @ W[gate].
    wih, whh, bias = [], [], []
    for l in range(L):
        k0, k1, k2, k3 = keys[3 + 4 * l: 7 + 4 * l]
        wih.append(u(k0, (4, H, H)))           # (gate, in, out)
        whh.append(u(k1, (4, H, H)))
        b_ih = u(k2, (4, 1, H))
        b_hh = u(k3, (4, 1, H))
        bias.append(b_ih + b_hh)               # (4, 1, H)

    # Layer 0: input matmul is hoisted into the wrapper -> (H, 4, H) bf16.
    params["wih0"] = jnp.transpose(wih[0], (1, 0, 2)).astype(jnp.bfloat16)
    params["b0"] = bias[0]                                  # (4, 1, H) f32
    params["whh0"] = whh[0].astype(jnp.bfloat16)            # (4, H, H)

    # Layers >= 1: fused [W_ih; W_hh] along the contraction axis.
    if L > 1:
        wcat = jnp.stack([jnp.concatenate([wih[l], whh[l]], axis=1)
                          for l in range(1, L)])            # (L-1, 4, 2H, H)
        bup = jnp.stack(bias[1:])                            # (L-1, 4, 1, H)
    else:
        wcat = jnp.zeros((1, 4, 2 * H, H), jnp.float32)      # unused dummy
        bup = jnp.zeros((1, 4, 1, H), jnp.float32)
    params["wcat"] = wcat.astype(jnp.bfloat16)
    params["bup"] = bup

    params["fc_w_t"] = u(keys[-2], (H, V)).astype(jnp.bfloat16)
    params["fc_b"] = u(keys[-1], (1, V))
    return params


# ----------------------------------------------------------------------------
# Full forward pass (mirrors the PyTorch module's forward, batch_first).
# ----------------------------------------------------------------------------
def forward(params, x, captions, *, num_layers, hidden_size, vocab_size):
    B = x.shape[0]
    H, V = hidden_size, vocab_size

    # projection(x).unsqueeze(1); embedding(captions[:, :-1]); cat along time.
    # (tiny ops -> plain XLA; note self.relu is unused in the reference forward)
    projected = x @ params["proj_w_t"] + params["proj_b"]            # (B, H)
    emb = jnp.take(params["embedding"], captions[:, :-1], axis=0)    # (B,S-1,H)
    lstm_in = jnp.concatenate([projected[:, None, :], emb], axis=1)  # (B, T, H)
    T = lstm_in.shape[1]

    x_tbh = jnp.transpose(lstm_in, (1, 0, 2))                        # (T, B, H)
    Bp = ((B + 7) // 8) * 8                                          # pad to 8 sublanes
    if Bp != B:
        x_tbh = jnp.pad(x_tbh, ((0, 0), (0, Bp - B), (0, 0)))

    # Hoisted layer-0 input projection for all timesteps at once, gate-major.
    xg = jnp.einsum("tbh,hgo->tgbo", x_tbh.astype(jnp.bfloat16),
                    params["wih0"],
                    preferred_element_type=jnp.float32)              # (T,4,Bp,H)
    xg = xg + params["b0"][None]                                     # fold bias

    h_top = lstm_recurrence(
        xg, params["whh0"], params["wcat"], params["bup"],
        num_layers=num_layers, hidden_size=H, seq_len=T, batch_pad=Bp)

    # Hoisted output projection over all (T * Bp) rows, tiled over V.
    logits_flat = fc_proj(h_top.reshape(T * Bp, H).astype(jnp.bfloat16),
                          params["fc_w_t"], params["fc_b"])          # (T*Bp, V)
    logits = logits_flat.reshape(T, Bp, V)[:, :B, :]
    return jnp.transpose(logits, (1, 0, 2))                          # (B, T, V)


if __name__ == "__main__":
    # Small, forward-consistent shapes.
    batch = 2
    input_size = 64      # image feature dim fed to `projection`
    hidden_size = 32
    number_layers = 2
    vocab_size = 128
    seq_len = 9          # caption length; LSTM sees 1 + (seq_len - 1) = 9 steps

    key = jax.random.PRNGKey(0)
    kp, kx, kc = jax.random.split(key, 3)
    params = init_params(kp, input_size, hidden_size, number_layers, vocab_size)

    x = jax.random.normal(kx, (batch, input_size), jnp.float32)
    captions = jax.random.randint(kc, (batch, seq_len), 0, vocab_size, jnp.int32)

    fwd = jax.jit(functools.partial(
        forward, num_layers=number_layers, hidden_size=hidden_size,
        vocab_size=vocab_size))
    logits = jax.block_until_ready(fwd(params, x, captions))

    assert logits.shape == (batch, seq_len, vocab_size), logits.shape
    assert bool(jnp.all(jnp.isfinite(logits)))
    print("KERNEL_OK")
</pallas_src>

<mosaic_0001>
module attributes {stable_mosaic.version = 11 : i64} {
  func.func @_lstm_recurrent_kernel(%arg0: i32, %arg1: memref<9x4x8x32xf32, #tpu.memory_space<vmem>>, %arg2: memref<4x32x32xbf16, #tpu.memory_space<vmem>>, %arg3: memref<1x4x64x32xbf16, #tpu.memory_space<vmem>>, %arg4: memref<1x4x1x32xf32, #tpu.memory_space<vmem>>, %arg5: memref<9x8x32xf32, #tpu.memory_space<vmem>>, %arg6: memref<2x8x32xf32, #tpu.memory_space<vmem>>, %arg7: memref<2x8x32xf32, #tpu.memory_space<vmem>>) attributes {dimension_semantics = [#tpu.dimension_semantics<arbitrary>], iteration_bounds = array<i64: 1>, scalar_prefetch = 0 : i64, scratch_operands = 2 : i64, tpu.core_type = #tpu.core_type<tc>, window_params = [{pipeline_mode = #tpu.pipeline_mode<synchronous>, transform_indices = @transform_0, window_bounds = array<i64: 9, 4, 8, 32>}, {pipeline_mode = #tpu.pipeline_mode<synchronous>, transform_indices = @transform_1, window_bounds = array<i64: 4, 32, 32>}, {pipeline_mode = #tpu.pipeline_mode<synchronous>, transform_indices = @transform_2, window_bounds = array<i64: 1, 4, 64, 32>}, {pipeline_mode = #tpu.pipeline_mode<synchronous>, transform_indices = @transform_3, window_bounds = array<i64: 1, 4, 1, 32>}, {pipeline_mode = #tpu.pipeline_mode<synchronous>, transform_indices = @transform_4, window_bounds = array<i64: 9, 8, 32>}]} {
    %cst = arith.constant 0.000000e+00 : f32
    %0 = vector.broadcast %cst : f32 to vector<2x8x32xf32>
    %c0 = arith.constant 0 : index
    %c0_0 = arith.constant 0 : index
    %c0_1 = arith.constant 0 : index
    %1 = vector.load %arg6[%c0, %c0_0, %c0_1] : memref<2x8x32xf32, #tpu.memory_space<vmem>>, vector<2x8x32xf32>
    tpu.vector_store %arg6[%c0, %c0_0, %c0_1], %0 {strides = array<i32>} : memref<2x8x32xf32, #tpu.memory_space<vmem>>, vector<2x8x32xf32>,
    %cst_2 = arith.constant 0.000000e+00 : f32
    %2 = vector.broadcast %cst_2 : f32 to vector<2x8x32xf32>
    %c0_3 = arith.constant 0 : index
    %c0_4 = arith.constant 0 : index
    %c0_5 = arith.constant 0 : index
    %3 = vector.load %arg7[%c0_3, %c0_4, %c0_5] : memref<2x8x32xf32, #tpu.memory_space<vmem>>, vector<2x8x32xf32>
    tpu.vector_store %arg7[%c0_3, %c0_4, %c0_5], %2 {strides = array<i32>} : memref<2x8x32xf32, #tpu.memory_space<vmem>>, vector<2x8x32xf32>,
    %c0_i32 = arith.constant 0 : i32
    %c9_i32 = arith.constant 9 : i32
    %4 = arith.addi %c0_i32, %c9_i32 : i32
    %c1_i32 = arith.constant 1 : i32
    scf.for %arg8 = %c0_i32 to %4 step %c1_i32  : i32 {
      %5 = arith.index_cast %arg8 : i32 to index
      %c0_7 = arith.constant 0 : index
      %c0_8 = arith.constant 0 : index
      %c0_9 = arith.constant 0 : index
      %6 = vector.load %arg1[%5, %c0_7, %c0_8, %c0_9] : memref<9x4x8x32xf32, #tpu.memory_space<vmem>>, vector<1x4x8x32xf32>
      %7 = vector.shape_cast %6 : vector<1x4x8x32xf32> to vector<4x8x32xf32>
      %c0_10 = arith.constant 0 : index
      %c0_11 = arith.constant 0 : index
      %c0_12 = arith.constant 0 : index
      %8 = vector.load %arg6[%c0_10, %c0_11, %c0_12] : memref<2x8x32xf32, #tpu.memory_space<vmem>>, vector<1x8x32xf32>
      %9 = vector.shape_cast %8 : vector<1x8x32xf32> to vector<8x32xf32>
      %c0_13 = arith.constant 0 : index
      %c0_14 = arith.constant 0 : index
      %c0_15 = arith.constant 0 : index
      %10 = vector.load %arg7[%c0_13, %c0_14, %c0_15] : memref<2x8x32xf32, #tpu.memory_space<vmem>>, vector<1x8x32xf32>
      %11 = vector.shape_cast %10 : vector<1x8x32xf32> to vector<8x32xf32>
      %12 = arith.truncf %9 : vector<8x32xf32> to vector<8x32xbf16>
      %13 = vector.extract_strided_slice %7 {offsets = [0, 0, 0], sizes = [1, 8, 32], strides = [1, 1, 1]} : vector<4x8x32xf32> to vector<1x8x32xf32>
      %14 = vector.shape_cast %13 : vector<1x8x32xf32> to vector<8x32xf32>
      %c0_16 = arith.constant 0 : index
      %c0_17 = arith.constant 0 : index
      %c0_18 = arith.constant 0 : index
      %15 = vector.load %arg2[%c0_16, %c0_17, %c0_18] : memref<4x32x32xbf16, #tpu.memory_space<vmem>>, vector<1x32x32xbf16>
      %16 = vector.shape_cast %15 : vector<1x32x32xbf16> to vector<32x32xbf16>
      %cst_19 = arith.constant dense<0.000000e+00> : vector<8x32xf32>
      %17 = tpu.matmul %12, %16, %cst_19 {dimension_numbers = #tpu.dot_dimension_numbers<[1], [0], [0], [1], [0, 0, 1, 1], [], []>} : vector<8x32xbf16>, vector<32x32xbf16>, vector<8x32xf32> -> vector<8x32xf32>
      %18 = arith.addf %14, %17 : vector<8x32xf32>
      %19 = vector.extract_strided_slice %7 {offsets = [1, 0, 0], sizes = [1, 8, 32], strides = [1, 1, 1]} : vector<4x8x32xf32> to vector<1x8x32xf32>
      %20 = vector.shape_cast %19 : vector<1x8x32xf32> to vector<8x32xf32>
      %c1 = arith.constant 1 : index
      %c0_20 = arith.constant 0 : index
      %c0_21 = arith.constant 0 : index
      %21 = vector.load %arg2[%c1, %c0_20, %c0_21] : memref<4x32x32xbf16, #tpu.memory_space<vmem>>, vector<1x32x32xbf16>
      %22 = vector.shape_cast %21 : vector<1x32x32xbf16> to vector<32x32xbf16>
      %cst_22 = arith.constant dense<0.000000e+00> : vector<8x32xf32>
      %23 = tpu.matmul %12, %22, %cst_22 {dimension_numbers = #tpu.dot_dimension_numbers<[1], [0], [0], [1], [0, 0, 1, 1], [], []>} : vector<8x32xbf16>, vector<32x32xbf16>, vector<8x32xf32> -> vector<8x32xf32>
      %24 = arith.addf %20, %23 : vector<8x32xf32>
      %25 = vector.extract_strided_slice %7 {offsets = [2, 0, 0], sizes = [1, 8, 32], strides = [1, 1, 1]} : vector<4x8x32xf32> to vector<1x8x32xf32>
      %26 = vector.shape_cast %25 : vector<1x8x32xf32> to vector<8x32xf32>
      %c2 = arith.constant 2 : index
      %c0_23 = arith.constant 0 : index
      %c0_24 = arith.constant 0 : index
      %27 = vector.load %arg2[%c2, %c0_23, %c0_24] : memref<4x32x32xbf16, #tpu.memory_space<vmem>>, vector<1x32x32xbf16>
      %28 = vector.shape_cast %27 : vector<1x32x32xbf16> to vector<32x32xbf16>
      %cst_25 = arith.constant dense<0.000000e+00> : vector<8x32xf32>
      %29 = tpu.matmul %12, %28, %cst_25 {dimension_numbers = #tpu.dot_dimension_numbers<[1], [0], [0], [1], [0, 0, 1, 1], [], []>} : vector<8x32xbf16>, vector<32x32xbf16>, vector<8x32xf32> -> vector<8x32xf32>
      %30 = arith.addf %26, %29 : vector<8x32xf32>
      %31 = vector.extract_strided_slice %7 {offsets = [3, 0, 0], sizes = [1, 8, 32], strides = [1, 1, 1]} : vector<4x8x32xf32> to vector<1x8x32xf32>
      %32 = vector.shape_cast %31 : vector<1x8x32xf32> to vector<8x32xf32>
      %c3 = arith.constant 3 : index
      %c0_26 = arith.constant 0 : index
      %c0_27 = arith.constant 0 : index
      %33 = vector.load %arg2[%c3, %c0_26, %c0_27] : memref<4x32x32xbf16, #tpu.memory_space<vmem>>, vector<1x32x32xbf16>
      %34 = vector.shape_cast %33 : vector<1x32x32xbf16> to vector<32x32xbf16>
      %cst_28 = arith.constant dense<0.000000e+00> : vector<8x32xf32>
      %35 = tpu.matmul %12, %34, %cst_28 {dimension_numbers = #tpu.dot_dimension_numbers<[1], [0], [0], [1], [0, 0, 1, 1], [], []>} : vector<8x32xbf16>, vector<32x32xbf16>, vector<8x32xf32> -> vector<8x32xf32>
      %36 = arith.addf %32, %35 : vector<8x32xf32>
      %37 = arith.negf %18 : vector<8x32xf32>
      %38 = math.exp %37 : vector<8x32xf32>
      %cst_29 = arith.constant 1.000000e+00 : f32
      %39 = vector.broadcast %cst_29 : f32 to vector<8x32xf32>
      %40 = arith.addf %39, %38 : vector<8x32xf32>
      %41 = arith.divf %39, %40 : vector<8x32xf32>
      %42 = arith.negf %24 : vector<8x32xf32>
      %43 = math.exp %42 : vector<8x32xf32>
      %cst_30 = arith.constant 1.000000e+00 : f32
      %44 = vector.broadcast %cst_30 : f32 to vector<8x32xf32>
      %45 = arith.addf %44, %43 : vector<8x32xf32>
      %46 = arith.divf %44, %45 : vector<8x32xf32>
      %47 = math.tanh %30 : vector<8x32xf32>
      %48 = arith.negf %36 : vector<8x32xf32>
      %49 = math.exp %48 : vector<8x32xf32>
      %cst_31 = arith.constant 1.000000e+00 : f32
      %50 = vector.broadcast %cst_31 : f32 to vector<8x32xf32>
      %51 = arith.addf %50, %49 : vector<8x32xf32>
      %52 = arith.divf %50, %51 : vector<8x32xf32>
      %53 = arith.mulf %46, %11 : vector<8x32xf32>
      %54 = arith.mulf %41, %47 : vector<8x32xf32>
      %55 = arith.addf %53, %54 : vector<8x32xf32>
      %56 = math.tanh %55 : vector<8x32xf32>
      %57 = arith.mulf %52, %56 : vector<8x32xf32>
      %c0_32 = arith.constant 0 : index
      %c0_33 = arith.constant 0 : index
      %c0_34 = arith.constant 0 : index
      %58 = vector.load %arg7[%c0_32, %c0_33, %c0_34] : memref<2x8x32xf32, #tpu.memory_space<vmem>>, vector<1x8x32xf32>
      %59 = vector.shape_cast %58 : vector<1x8x32xf32> to vector<8x32xf32>
      %60 = vector.shape_cast %55 : vector<8x32xf32> to vector<1x8x32xf32>
      tpu.vector_store %arg7[%c0_32, %c0_33, %c0_34], %60 {strides = array<i32>} : memref<2x8x32xf32, #tpu.memory_space<vmem>>, vector<1x8x32xf32>,
      %c0_35 = arith.constant 0 : index
      %c0_36 = arith.constant 0 : index
      %c0_37 = arith.constant 0 : index
      %61 = vector.load %arg6[%c0_35, %c0_36, %c0_37] : memref<2x8x32xf32, #tpu.memory_space<vmem>>, vector<1x8x32xf32>
      %62 = vector.shape_cast %61 : vector<1x8x32xf32> to vector<8x32xf32>
      %63 = vector.shape_cast %57 : vector<8x32xf32> to vector<1x8x32xf32>
      tpu.vector_store %arg6[%c0_35, %c0_36, %c0_37], %63 {strides = array<i32>} : memref<2x8x32xf32, #tpu.memory_space<vmem>>, vector<1x8x32xf32>,
      %c1_38 = arith.constant 1 : index
      %c0_39 = arith.constant 0 : index
      %c0_40 = arith.constant 0 : index
      %64 = vector.load %arg6[%c1_38, %c0_39, %c0_40] : memref<2x8x32xf32, #tpu.memory_space<vmem>>, vector<1x8x32xf32>
      %65 = vector.shape_cast %64 : vector<1x8x32xf32> to vector<8x32xf32>
      %c1_41 = arith.constant 1 : index
      %c0_42 = arith.constant 0 : index
      %c0_43 = arith.constant 0 : index
      %66 = vector.load %arg7[%c1_41, %c0_42, %c0_43] : memref<2x8x32xf32, #tpu.memory_space<vmem>>, vector<1x8x32xf32>
      %67 = vector.shape_cast %66 : vector<1x8x32xf32> to vector<8x32xf32>
      %68 = tpu.concatenate %57, %65 in 1 : vector<8x32xf32>, vector<8x32xf32> -> vector<8x64xf32>
      %69 = arith.truncf %68 : vector<8x64xf32> to vector<8x64xbf16>
      %c0_44 = arith.constant 0 : index
      %c0_45 = arith.constant 0 : index
      %c0_46 = arith.constant 0 : index
      %c0_47 = arith.constant 0 : index
      %70 = vector.load %arg4[%c0_44, %c0_45, %c0_46, %c0_47] : memref<1x4x1x32xf32, #tpu.memory_space<vmem>>, vector<1x1x1x32xf32>
      %71 = vector.shape_cast %70 : vector<1x1x1x32xf32> to vector<1x32xf32>
      %c0_48 = arith.constant 0 : index
      %c0_49 = arith.constant 0 : index
      %c0_50 = arith.constant 0 : index
      %c0_51 = arith.constant 0 : index
      %72 = vector.load %arg3[%c0_48, %c0_49, %c0_50, %c0_51] : memref<1x4x64x32xbf16, #tpu.memory_space<vmem>>, vector<1x1x64x32xbf16>
      %73 = vector.shape_cast %72 : vector<1x1x64x32xbf16> to vector<64x32xbf16>
      %cst_52 = arith.constant dense<0.000000e+00> : vector<8x32xf32>
      %74 = tpu.matmul %69, %73, %cst_52 {dimension_numbers = #tpu.dot_dimension_numbers<[1], [0], [0], [1], [0, 0, 1, 1], [], []>} : vector<8x64xbf16>, vector<64x32xbf16>, vector<8x32xf32> -> vector<8x32xf32>
      %75 = vector.broadcast %71 : vector<1x32xf32> to vector<8x32xf32>
      %76 = arith.addf %75, %74 : vector<8x32xf32>
      %c0_53 = arith.constant 0 : index
      %c1_54 = arith.constant 1 : index
      %c0_55 = arith.constant 0 : index
      %c0_56 = arith.constant 0 : index
      %77 = vector.load %arg4[%c0_53, %c1_54, %c0_55, %c0_56] : memref<1x4x1x32xf32, #tpu.memory_space<vmem>>, vector<1x1x1x32xf32>
      %78 = vector.shape_cast %77 : vector<1x1x1x32xf32> to vector<1x32xf32>
      %c0_57 = arith.constant 0 : index
      %c1_58 = arith.constant 1 : index
      %c0_59 = arith.constant 0 : index
      %c0_60 = arith.constant 0 : index
      %79 = vector.load %arg3[%c0_57, %c1_58, %c0_59, %c0_60] : memref<1x4x64x32xbf16, #tpu.memory_space<vmem>>, vector<1x1x64x32xbf16>
      %80 = vector.shape_cast %79 : vector<1x1x64x32xbf16> to vector<64x32xbf16>
      %cst_61 = arith.constant dense<0.000000e+00> : vector<8x32xf32>
      %81 = tpu.matmul %69, %80, %cst_61 {dimension_numbers = #tpu.dot_dimension_numbers<[1], [0], [0], [1], [0, 0, 1, 1], [], []>} : vector<8x64xbf16>, vector<64x32xbf16>, vector<8x32xf32> -> vector<8x32xf32>
      %82 = vector.broadcast %78 : vector<1x32xf32> to vector<8x32xf32>
      %83 = arith.addf %82, %81 : vector<8x32xf32>
      %c0_62 = arith.constant 0 : index
      %c2_63 = arith.constant 2 : index
      %c0_64 = arith.constant 0 : index
      %c0_65 = arith.constant 0 : index
      %84 = vector.load %arg4[%c0_62, %c2_63, %c0_64, %c0_65] : memref<1x4x1x32xf32, #tpu.memory_space<vmem>>, vector<1x1x1x32xf32>
      %85 = vector.shape_cast %84 : vector<1x1x1x32xf32> to vector<1x32xf32>
      %c0_66 = arith.constant 0 : index
      %c2_67 = arith.constant 2 : index
      %c0_68 = arith.constant 0 : index
      %c0_69 = arith.constant 0 : index
      %86 = vector.load %arg3[%c0_66, %c2_67, %c0_68, %c0_69] : memref<1x4x64x32xbf16, #tpu.memory_space<vmem>>, vector<1x1x64x32xbf16>
      %87 = vector.shape_cast %86 : vector<1x1x64x32xbf16> to vector<64x32xbf16>
      %cst_70 = arith.constant dense<0.000000e+00> : vector<8x32xf32>
      %88 = tpu.matmul %69, %87, %cst_70 {dimension_numbers = #tpu.dot_dimension_numbers<[1], [0], [0], [1], [0, 0, 1, 1], [], []>} : vector<8x64xbf16>, vector<64x32xbf16>, vector<8x32xf32> -> vector<8x32xf32>
      %89 = vector.broadcast %85 : vector<1x32xf32> to vector<8x32xf32>
      %90 = arith.addf %89, %88 : vector<8x32xf32>
      %c0_71 = arith.constant 0 : index
      %c3_72 = arith.constant 3 : index
      %c0_73 = arith.constant 0 : index
      %c0_74 = arith.constant 0 : index
      %91 = vector.load %arg4[%c0_71, %c3_72, %c0_73, %c0_74] : memref<1x4x1x32xf32, #tpu.memory_space<vmem>>, vector<1x1x1x32xf32>
      %92 = vector.shape_cast %91 : vector<1x1x1x32xf32> to vector<1x32xf32>
      %c0_75 = arith.constant 0 : index
      %c3_76 = arith.constant 3 : index
      %c0_77 = arith.constant 0 : index
      %c0_78 = arith.constant 0 : index
      %93 = vector.load %arg3[%c0_75, %c3_76, %c0_77, %c0_78] : memref<1x4x64x32xbf16, #tpu.memory_space<vmem>>, vector<1x1x64x32xbf16>
      %94 = vector.shape_cast %93 : vector<1x1x64x32xbf16> to vector<64x32xbf16>
      %cst_79 = arith.constant dense<0.000000e+00> : vector<8x32xf32>
      %95 = tpu.matmul %69, %94, %cst_79 {dimension_numbers = #tpu.dot_dimension_numbers<[1], [0], [0], [1], [0, 0, 1, 1], [], []>} : vector<8x64xbf16>, vector<64x32xbf16>, vector<8x32xf32> -> vector<8x32xf32>
      %96 = vector.broadcast %92 : vector<1x32xf32> to vector<8x32xf32>
      %97 = arith.addf %96, %95 : vector<8x32xf32>
      %98 = arith.negf %76 : vector<8x32xf32>
      %99 = math.exp %98 : vector<8x32xf32>
      %cst_80 = arith.constant 1.000000e+00 : f32
      %100 = vector.broadcast %cst_80 : f32 to vector<8x32xf32>
      %101 = arith.addf %100, %99 : vector<8x32xf32>
      %102 = arith.divf %100, %101 : vector<8x32xf32>
      %103 = arith.negf %83 : vector<8x32xf32>
      %104 = math.exp %103 : vector<8x32xf32>
      %cst_81 = arith.constant 1.000000e+00 : f32
      %105 = vector.broadcast %cst_81 : f32 to vector<8x32xf32>
      %106 = arith.addf %105, %104 : vector<8x32xf32>
      %107 = arith.divf %105, %106 : vector<8x32xf32>
      %108 = math.tanh %90 : vector<8x32xf32>
      %109 = arith.negf %97 : vector<8x32xf32>
      %110 = math.exp %109 : vector<8x32xf32>
      %cst_82 = arith.constant 1.000000e+00 : f32
      %111 = vector.broadcast %cst_82 : f32 to vector<8x32xf32>
      %112 = arith.addf %111, %110 : vector<8x32xf32>
      %113 = arith.divf %111, %112 : vector<8x32xf32>
      %114 = arith.mulf %107, %67 : vector<8x32xf32>
      %115 = arith.mulf %102, %108 : vector<8x32xf32>
      %116 = arith.addf %114, %115 : vector<8x32xf32>
      %117 = math.tanh %116 : vector<8x32xf32>
      %118 = arith.mulf %113, %117 : vector<8x32xf32>
      %c1_83 = arith.constant 1 : index
      %c0_84 = arith.constant 0 : index
      %c0_85 = arith.constant 0 : index
      %119 = vector.load %arg7[%c1_83, %c0_84, %c0_85] : memref<2x8x32xf32, #tpu.memory_space<vmem>>, vector<1x8x32xf32>
      %120 = vector.shape_cast %119 : vector<1x8x32xf32> to vector<8x32xf32>
      %121 = vector.shape_cast %116 : vector<8x32xf32> to vector<1x8x32xf32>
      tpu.vector_store %arg7[%c1_83, %c0_84, %c0_85], %121 {strides = array<i32>} : memref<2x8x32xf32, #tpu.memory_space<vmem>>, vector<1x8x32xf32>,
      %c1_86 = arith.constant 1 : index
      %c0_87 = arith.constant 0 : index
      %c0_88 = arith.constant 0 : index
      %122 = vector.load %arg6[%c1_86, %c0_87, %c0_88] : memref<2x8x32xf32, #tpu.memory_space<vmem>>, vector<1x8x32xf32>
      %123 = vector.shape_cast %122 : vector<1x8x32xf32> to vector<8x32xf32>
      %124 = vector.shape_cast %118 : vector<8x32xf32> to vector<1x8x32xf32>
      tpu.vector_store %arg6[%c1_86, %c0_87, %c0_88], %124 {strides = array<i32>} : memref<2x8x32xf32, #tpu.memory_space<vmem>>, vector<1x8x32xf32>,
      %125 = arith.index_cast %arg8 : i32 to index
      %c0_89 = arith.constant 0 : index
      %c0_90 = arith.constant 0 : index
      %126 = vector.load %arg5[%125, %c0_89, %c0_90] : memref<9x8x32xf32, #tpu.memory_space<vmem>>, vector<1x8x32xf32>
      %127 = vector.shape_cast %126 : vector<1x8x32xf32> to vector<8x32xf32>
      %128 = vector.shape_cast %118 : vector<8x32xf32> to vector<1x8x32xf32>
      tpu.vector_store %arg5[%125, %c0_89, %c0_90], %128 {strides = array<i32>} : memref<9x8x32xf32, #tpu.memory_space<vmem>>, vector<1x8x32xf32>,
    }
    %c9_i32_6 = arith.constant 9 : i32
    return
  }
  func.func @transform_0(%arg0: i32) -> (i32, i32, i32, i32) {
    %c0_i32 = arith.constant 0 : i32
    %c0_i32_0 = arith.constant 0 : i32
    %c0_i32_1 = arith.constant 0 : i32
    %c0_i32_2 = arith.constant 0 : i32
    %c0_i32_3 = arith.constant 0 : i32
    return %c0_i32, %c0_i32_0, %c0_i32_1, %c0_i32_2 : i32, i32, i32, i32
  }
  func.func @transform_1(%arg0: i32) -> (i32, i32, i32) {
    %c0_i32 = arith.constant 0 : i32
    %c0_i32_0 = arith.constant 0 : i32
    %c0_i32_1 = arith.constant 0 : i32
    %c0_i32_2 = arith.constant 0 : i32
    return %c0_i32, %c0_i32_0, %c0_i32_1 : i32, i32, i32
  }
  func.func @transform_2(%arg0: i32) -> (i32, i32, i32, i32) {
    %c0_i32 = arith.constant 0 : i32
    %c0_i32_0 = arith.constant 0 : i32
    %c0_i32_1 = arith.constant 0 : i32
    %c0_i32_2 = arith.constant 0 : i32
    %c0_i32_3 = arith.constant 0 : i32
    return %c0_i32, %c0_i32_0, %c0_i32_1, %c0_i32_2 : i32, i32, i32, i32
  }
  func.func @transform_3(%arg0: i32) -> (i32, i32, i32, i32) {
    %c0_i32 = arith.constant 0 : i32
    %c0_i32_0 = arith.constant 0 : i32
    %c0_i32_1 = arith.constant 0 : i32
    %c0_i32_2 = arith.constant 0 : i32
    %c0_i32_3 = arith.constant 0 : i32
    return %c0_i32, %c0_i32_0, %c0_i32_1, %c0_i32_2 : i32, i32, i32, i32
  }
  func.func @transform_4(%arg0: i32) -> (i32, i32, i32) {
    %c0_i32 = arith.constant 0 : i32
    %c0_i32_0 = arith.constant 0 : i32
    %c0_i32_1 = arith.constant 0 : i32
    %c0_i32_2 = arith.constant 0 : i32
    return %c0_i32, %c0_i32_0, %c0_i32_1 : i32, i32, i32
  }
}

module attributes {stable_mosaic.version = 11 : i64} {
  func.func @_fc_kernel(%arg0: i32, %arg1: memref<72x32xbf16, #tpu.memory_space<vmem>>, %arg2: memref<32x128xbf16, #tpu.memory_space<vmem>>, %arg3: memref<1x128xf32, #tpu.memory_space<vmem>>, %arg4: memref<72x128xf32, #tpu.memory_space<vmem>>) attributes {dimension_semantics = [#tpu.dimension_semantics<parallel>], iteration_bounds = array<i64: 1>, scalar_prefetch = 0 : i64, scratch_operands = 0 : i64, tpu.core_type = #tpu.core_type<tc>, window_params = [{pipeline_mode = #tpu.pipeline_mode<synchronous>, transform_indices = @transform_0, window_bounds = array<i64: 72, 32>}, {transform_indices = @transform_1, window_bounds = array<i64: 32, 128>}, {transform_indices = @transform_2, window_bounds = array<i64: 1, 128>}, {transform_indices = @transform_3, window_bounds = array<i64: 72, 128>}]} {
    %c0 = arith.constant 0 : index
    %c0_0 = arith.constant 0 : index
    %0 = vector.load %arg1[%c0, %c0_0] : memref<72x32xbf16, #tpu.memory_space<vmem>>, vector<72x32xbf16>
    %c0_1 = arith.constant 0 : index
    %c0_2 = arith.constant 0 : index
    %1 = vector.load %arg2[%c0_1, %c0_2] : memref<32x128xbf16, #tpu.memory_space<vmem>>, vector<32x128xbf16>
    %cst = arith.constant dense<0.000000e+00> : vector<72x128xf32>
    %2 = tpu.matmul %0, %1, %cst {dimension_numbers = #tpu.dot_dimension_numbers<[1], [0], [0], [1], [0, 0, 1, 1], [], []>} : vector<72x32xbf16>, vector<32x128xbf16>, vector<72x128xf32> -> vector<72x128xf32>
    %c0_3 = arith.constant 0 : index
    %c0_4 = arith.constant 0 : index
    %3 = vector.load %arg3[%c0_3, %c0_4] : memref<1x128xf32, #tpu.memory_space<vmem>>, vector<1x128xf32>
    %4 = vector.broadcast %3 : vector<1x128xf32> to vector<72x128xf32>
    %5 = arith.addf %2, %4 : vector<72x128xf32>
    %c0_5 = arith.constant 0 : index
    %c0_6 = arith.constant 0 : index
    %6 = vector.load %arg4[%c0_5, %c0_6] : memref<72x128xf32, #tpu.memory_space<vmem>>, vector<72x128xf32>
    tpu.vector_store %arg4[%c0_5, %c0_6], %5 {strides = array<i32>} : memref<72x128xf32, #tpu.memory_space<vmem>>, vector<72x128xf32>,
    return
  }
  func.func @transform_0(%arg0: i32) -> (i32, i32) {
    %c0_i32 = arith.constant 0 : i32
    %c0_i32_0 = arith.constant 0 : i32
    %c0_i32_1 = arith.constant 0 : i32
    return %c0_i32, %c0_i32_0 : i32, i32
  }
  func.func @transform_1(%arg0: i32) -> (i32, i32) {
    %c0_i32 = arith.constant 0 : i32
    %c0_i32_0 = arith.constant 0 : i32
    return %c0_i32, %arg0 : i32, i32
  }
  func.func @transform_2(%arg0: i32) -> (i32, i32) {
    %c0_i32 = arith.constant 0 : i32
    %c0_i32_0 = arith.constant 0 : i32
    return %c0_i32, %arg0 : i32, i32
  }
  func.func @transform_3(%arg0: i32) -> (i32, i32) {
    %c0_i32 = arith.constant 0 : i32
    %c0_i32_0 = arith.constant 0 : i32
    return %c0_i32, %arg0 : i32, i32
  }
}

</mosaic_0001>

<llo_original>
// kernel: forward.3
$region0: #{forward.3}
  #allocation0 [shape = 'u32[]', space=smem, size = 0x4, offset = 0x4, fixed_abs, tag = 'smem constant byte address 0x4 - core index']
  #allocation1 [shape = 'u32[144,128]{1,0:T(1,128)}', space=vmem, size = 0x12000, scoped, tag = 'internal scratch']
  %s0 = inlined_call_operand.vmem [shape: bf16[72,32], index: 0, kind: input, shape index: {}]
  %s1 = inlined_call_operand.vmem [shape: bf16[32,128], index: 1, kind: input, shape index: {}]
  %s2 = inlined_call_operand.vmem [shape: f32[1,128], index: 2, kind: input, shape index: {}]
  %s3 = inlined_call_operand.vmem [shape: f32[72,128], index: 3, kind: output, shape index: {}]
  %s4 = sld [smem:[#allocation0]]
  $region22: #{forward.3} parent=0
    _
  %s6 = ssub.s32 1, %s4
  %s7 = scalar_select 0, %s6, %s4
  // Predicated region
  $region2: #{forward.3} parent=0 // pred_check
    _
  $region3: #{forward.3} parent=0 // pred_check_branch
    %9 = sbr.rel (0) target = $region5
  $region4: #{forward.3} parent=0 // pred_region
    _
  $region5: #{forward.3} parent=0 // pred_fallthru
    _
  // Predicated region
  $region6: #{forward.3} parent=0 // pred_check
    _
  $region7: #{forward.3} parent=0 // pred_check_branch
    %11 = sbr.rel (0) target = $region9
  $region8: #{forward.3} parent=0 // pred_region
    _
  $region9: #{forward.3} parent=0 // pred_fallthru
    _
  // Predicated region
  $region10: #{forward.3} parent=0 // pred_check
    _
  $region11: #{forward.3} parent=0 // pred_check_branch
    %13 = sbr.rel (0) target = $region13
  $region12: #{forward.3} parent=0 // pred_region
    _
  $region13: #{forward.3} parent=0 // pred_fallthru
    _
  %v15 = vld [vmem:[%s0] sm:$0xf]
  %v16 = vld [vmem:[%s0 + $0x4] sm:$0xf]
  %v17 = vld [vmem:[%s0 + $0x8] sm:$0xf]
  %v18 = vld [vmem:[%s0 + $0xc] sm:$0xf]
  %v19 = vld [vmem:[%s0 + $0x10] sm:$0xf]
  %v20 = vld [vmem:[%s0 + $0x14] sm:$0xf]
  %v21 = vld [vmem:[%s0 + $0x18] sm:$0xf]
  %v22 = vld [vmem:[%s0 + $0x1c] sm:$0xf]
  %v23 = vld [vmem:[%s0 + $0x20] sm:$0xf]
  %v24 = vld [vmem:[%s1] sm:$0xf]
  %v25 = vld [vmem:[%s1 + $0x4] sm:$0xf]
  %v26 = vld [vmem:[%s1 + $0x8] sm:$0xf]
  %v27 = vld [vmem:[%s1 + $0xc] sm:$0xf]
  %v28 = vld [vmem:[%s2] sm:$0x1]
  %v30 = vlaneseq
  %v31 = vshrl.u32 %v30, 7
  %v32 = vsub.s32 0, %v31
  %v33 = vrot.slane %v28, %v32
  %v44 = vunpack.c.l.b16 %v15
  %v45 = vunpack.c.l.b16 %v16
  %v46 = vunpack.c.l.b16 %v17
  %v47 = vunpack.c.l.b16 %v18
  %v48 = vunpack.c.l.b16 %v19
  %v49 = vunpack.c.l.b16 %v20
  %v50 = vunpack.c.l.b16 %v21
  %v51 = vunpack.c.l.b16 %v22
  %v52 = vunpack.c.l.b16 %v23
  %v53 = vpack.c.b16 %v45, %v44
  %v54 = vpack.c.b16 %v47, %v46
  %v55 = vpack.c.b16 %v49, %v48
  %v56 = vpack.c.b16 %v51, %v50
  %v57 = vpack.c.b16 %v52, %v52
  %v62 = vunpack.c.l.b16 %v24
  %v63 = vunpack.c.l.b16 %v25
  %v64 = vunpack.c.l.b16 %v26
  %v65 = vunpack.c.l.b16 %v27
  %v66 = vpack.c.b16 %v63, %v62
  %v67 = vpack.c.b16 %v65, %v64
  %vm70 = vcmask 261120
  %v72 = vsel %vm70, %v53, 0
  %v75 = vsel %vm70, %v54, 0
  %v78 = vsel %vm70, %v55, 0
  %v81 = vsel %vm70, %v56, 0
  %v84 = vsel %vm70, %v57, 0
  %86 = vmatprep.subr.bf16.mxu0 0
  %87 = vmatpush1.bf16.msra.mxu0 %v66
  %88 = vmatprep.subr.bf16.mxu0 0
  %89 = vmatpush1.bf16.msra.mxu0 %v67
  %90 = vmatprep.subr.bf16.mxu0 0
  %91 = vmatpush1.bf16.msra.mxu0 0
  %92 = vmatprep.subr.bf16.mxu0 0
  %93 = vmatpush1.bf16.msra.mxu0 0
  %94 = vmatprep.subr.bf16.mxu0 0
  %95 = vmatpush1.bf16.msra.mxu0 0
  %96 = vmatprep.subr.bf16.mxu0 0
  %97 = vmatpush1.bf16.msra.mxu0 0
  %98 = vmatprep.subr.bf16.mxu0 0
  %99 = vmatpush1.bf16.msra.mxu0 0
  %100 = vmatprep.subr.bf16.mxu0 0
  %101 = vmatpush1.bf16.msra.mxu0 0
  %102 = vmatprep.subr.bf16.mxu0 0
  %103 = vmatpush1.bf16.msra.mxu0 0
  %104 = vmatprep.subr.bf16.mxu0 0
  %105 = vmatpush1.bf16.msra.mxu0 0
  %106 = vmatprep.subr.bf16.mxu0 0
  %107 = vmatpush1.bf16.msra.mxu0 0
  %108 = vmatprep.subr.bf16.mxu0 0
  %109 = vmatpush1.bf16.msra.mxu0 0
  %110 = vmatprep.subr.bf16.mxu0 0
  %111 = vmatpush1.bf16.msra.mxu0 0
  %112 = vmatprep.subr.bf16.mxu0 0
  %113 = vmatpush1.bf16.msra.mxu0 0
  %114 = vmatprep.subr.bf16.mxu0 0
  %115 = vmatpush1.bf16.msra.mxu0 0
  %116 = vmatprep.subr.bf16.mxu0 0
  %117 = vmatpush1.bf16.msra.mxu0 0
  %118 = vmatprep.mubr.bf16.mxu0 0
  %119 = vmatmul.mubr.bf16.gmra.mrb[0].mxu0 %v72
  %v120 = vpop.f32.mrb[0].mxu0
  %v121 = vadd.f32 %v33, %v120
  %v122 = vpop.f32.mrb[0].mxu0
  %v123 = vpop.f32.mrb[0].mxu0
  %v124 = vadd.f32 %v33, %v123
  %v125 = vpop.f32.mrb[0].mxu0
  %126 = vmatprep.mubr.bf16.mxu0 0
  %127 = vmatmul.mubr.bf16.gmra.mrb[0].mxu0 %v75
  %v128 = vpop.f32.mrb[0].mxu0
  %v129 = vadd.f32 %v33, %v128
  %v130 = vpop.f32.mrb[0].mxu0
  %v131 = vpop.f32.mrb[0].mxu0
  %v132 = vadd.f32 %v33, %v131
  %v133 = vpop.f32.mrb[0].mxu0
  %134 = vmatprep.mubr.bf16.mxu0 0
  %135 = vmatmul.mubr.bf16.gmra.mrb[0].mxu0 %v78
  %v136 = vpop.f32.mrb[0].mxu0
  %v137 = vadd.f32 %v33, %v136
  %v138 = vpop.f32.mrb[0].mxu0
  %v139 = vpop.f32.mrb[0].mxu0
  %v140 = vadd.f32 %v33, %v139
  %v141 = vpop.f32.mrb[0].mxu0
  %142 = vmatprep.mubr.bf16.mxu0 0
  %143 = vmatmul.mubr.bf16.gmra.mrb[0].mxu0 %v81
  %v144 = vpop.f32.mrb[0].mxu0
  %v145 = vadd.f32 %v33, %v144
  %v146 = vpop.f32.mrb[0].mxu0
  %v147 = vpop.f32.mrb[0].mxu0
  %v148 = vadd.f32 %v33, %v147
  %v149 = vpop.f32.mrb[0].mxu0
  %150 = vmatprep.mubr.bf16.mxu0 0
  %151 = vmatmul.mubr.bf16.gmra.mrb[0].mxu0 %v84
  %v152 = vpop.f32.mrb[0].mxu0
  %v153 = vadd.f32 %v33, %v152
  %v154 = vpop.f32.mrb[0].mxu0
  %v155 = vpop.f32.mrb[0].mxu0
  %v156 = vpop.f32.mrb[0].mxu0
  %157 = vdwg.mxu0
  %158 = vst [vmem:[%s3] sm:$0xff] %v121
  %159 = vst [vmem:[%s3 + $0x8] sm:$0xff] %v124
  %160 = vst [vmem:[%s3 + $0x10] sm:$0xff] %v129
  %161 = vst [vmem:[%s3 + $0x18] sm:$0xff] %v132
  %162 = vst [vmem:[%s3 + $0x20] sm:$0xff] %v137
  %163 = vst [vmem:[%s3 + $0x28] sm:$0xff] %v140
  %164 = vst [vmem:[%s3 + $0x30] sm:$0xff] %v145
  %165 = vst [vmem:[%s3 + $0x38] sm:$0xff] %v148
  %166 = vst [vmem:[%s3 + $0x40] sm:$0xff] %v153
  // Predicated region
  $region14: #{forward.3} parent=0 // pred_check
    _
  $region15: #{forward.3} parent=0 // pred_check_branch
    %168 = sbr.rel (0) target = $region17
  $region16: #{forward.3} parent=0 // pred_region
    _
  $region17: #{forward.3} parent=0 // pred_fallthru
    _
  // Predicated region
  $region18: #{forward.3} parent=0 // pred_check
    _
  $region19: #{forward.3} parent=0 // pred_check_branch
    %170 = sbr.rel (0) target = $region21
  $region20: #{forward.3} parent=0 // pred_region
    _
  $region21: #{forward.3} parent=0 // pred_fallthru
    _

// kernel: forward.2
$region0: #{forward.2}
  #allocation0 [shape = 'u32[]', space=smem, size = 0x4, offset = 0x4, fixed_abs, tag = 'smem constant byte address 0x4 - core index']
  #allocation1 [shape = 'u32[144,128]{1,0:T(1,128)}', space=vmem, size = 0x12000, scoped, tag = 'internal scratch']
  #allocation2 [shape = 'f32[2,8,32]{2,1,0:T(8,128)}', space=vmem, size = 0x2000, scoped, tag = 'scratch operand']
  #allocation3 [shape = 'f32[2,8,32]{2,1,0:T(8,128)}', space=vmem, size = 0x2000, scoped, tag = 'scratch operand']
  %s0 = inlined_call_operand.vmem [shape: f32[9,4,8,32], index: 0, kind: input, shape index: {}]
  %s1 = inlined_call_operand.vmem [shape: bf16[4,32,32], index: 1, kind: input, shape index: {}]
  %s2 = inlined_call_operand.vmem [shape: bf16[1,4,64,32], index: 2, kind: input, shape index: {}]
  %s3 = inlined_call_operand.vmem [shape: f32[1,4,1,32], index: 3, kind: input, shape index: {}]
  %s4 = inlined_call_operand.vmem [shape: f32[9,8,32], index: 4, kind: output, shape index: {}]
  %s5 = sld [smem:[#allocation0]]
  $region33: #{forward.2} parent=0
    _
  %s7 = ssub.s32 1, %s5
  %s8 = scalar_select 0, %s7, %s5
  // Predicated region
  $region2: #{forward.2} parent=0 // pred_check
    _
  $region3: #{forward.2} parent=0 // pred_check_branch
    %10 = sbr.rel (0) target = $region5
  $region4: #{forward.2} parent=0 // pred_region
    _
  $region5: #{forward.2} parent=0 // pred_fallthru
    _
  // Predicated region
  $region6: #{forward.2} parent=0 // pred_check
    _
  $region7: #{forward.2} parent=0 // pred_check_branch
    %12 = sbr.rel (0) target = $region9
  $region8: #{forward.2} parent=0 // pred_region
    _
  $region9: #{forward.2} parent=0 // pred_fallthru
    _
  // Predicated region
  $region10: #{forward.2} parent=0 // pred_check
    _
  $region11: #{forward.2} parent=0 // pred_check_branch
    %14 = sbr.rel (0) target = $region13
  $region12: #{forward.2} parent=0 // pred_region
    _
  $region13: #{forward.2} parent=0 // pred_fallthru
    _
  // Predicated region
  $region14: #{forward.2} parent=0 // pred_check
    _
  $region15: #{forward.2} parent=0 // pred_check_branch
    %16 = sbr.rel (0) target = $region17
  $region16: #{forward.2} parent=0 // pred_region
    _
  $region17: #{forward.2} parent=0 // pred_fallthru
    _
  %vm18 = vcmask 261120
  %19 = vst.msk [vmem:[#allocation2] sm:$0xff] %vm18, 0.0
  %20 = vst.msk [vmem:[#allocation2 + $0x8] sm:$0xff] %vm18, 0.0
  %21 = vst.msk [vmem:[#allocation3] sm:$0xff] %vm18, 0.0
  %22 = vst.msk [vmem:[#allocation3 + $0x8] sm:$0xff] %vm18, 0.0
  loop: start=0, step=1, limit=9
  $region18: #{forward.2} parent=0 // loop_pre_header
    _
  $region19: #{forward.2} parent=0 // loop_header
    %s24 = sphi 0, %s28
    %p25 = scmp.ge.s32.totalorder %s24, 9
  $region20: #{forward.2} parent=0 // loop_header_branch
    %27 = sbr.rel (%p25) target = $region24
  $region21: #{forward.2} parent=0 // loop_body
    %s29 = smul.u32 %s24, 32
    %s30 = scalar_lea.vmem %s0, %s29
    %v31 = vld [vmem:[%s30] sm:$0xff]
    %v32 = vld [vmem:[%s30 + $0x8] sm:$0xff]
    %v33 = vld [vmem:[%s30 + $0x10] sm:$0xff]
    %v34 = vld [vmem:[%s30 + $0x18] sm:$0xff]
    %v35 = vld [vmem:[#allocation2] sm:$0xff]
    %v36 = vld [vmem:[#allocation3] sm:$0xff]
    %v37 = vpack.c.bf16 %v35, %v35
    %v38 = vld [vmem:[%s1] sm:$0xf]
    %v39 = vld [vmem:[%s1 + $0x4] sm:$0xf]
    %v40 = vld [vmem:[%s1 + $0x8] sm:$0xf]
    %v41 = vld [vmem:[%s1 + $0xc] sm:$0xf]
    %v46 = vunpack.c.l.b16 %v38
    %v47 = vunpack.c.l.b16 %v39
    %v48 = vunpack.c.l.b16 %v40
    %v49 = vunpack.c.l.b16 %v41
    %v50 = vpack.c.b16 %v47, %v46
    %v51 = vpack.c.b16 %v49, %v48
    %v55 = vsel %vm18, %v37, 0
    %57 = vmatprep.subr.bf16.mxu0 0
    %58 = vmatpush1.bf16.msra.mxu0 %v50
    %59 = vmatprep.subr.bf16.mxu0 0
    %60 = vmatpush1.bf16.msra.mxu0 %v51
    %61 = vmatprep.subr.bf16.mxu0 0
    %62 = vmatpush1.bf16.msra.mxu0 0
    %63 = vmatprep.subr.bf16.mxu0 0
    %64 = vmatpush1.bf16.msra.mxu0 0
    %65 = vmatprep.subr.bf16.mxu0 0
    %66 = vmatpush1.bf16.msra.mxu0 0
    %67 = vmatprep.subr.bf16.mxu0 0
    %68 = vmatpush1.bf16.msra.mxu0 0
    %69 = vmatprep.subr.bf16.mxu0 0
    %70 = vmatpush1.bf16.msra.mxu0 0
    %71 = vmatprep.subr.bf16.mxu0 0
    %72 = vmatpush1.bf16.msra.mxu0 0
    %73 = vmatprep.subr.bf16.mxu0 0
    %74 = vmatpush1.bf16.msra.mxu0 0
    %75 = vmatprep.subr.bf16.mxu0 0
    %76 = vmatpush1.bf16.msra.mxu0 0
    %77 = vmatprep.subr.bf16.mxu0 0
    %78 = vmatpush1.bf16.msra.mxu0 0
    %79 = vmatprep.subr.bf16.mxu0 0
    %80 = vmatpush1.bf16.msra.mxu0 0
    %81 = vmatprep.subr.bf16.mxu0 0
    %82 = vmatpush1.bf16.msra.mxu0 0
    %83 = vmatprep.subr.bf16.mxu0 0
    %84 = vmatpush1.bf16.msra.mxu0 0
    %85 = vmatprep.subr.bf16.mxu0 0
    %86 = vmatpush1.bf16.msra.mxu0 0
    %87 = vmatprep.subr.bf16.mxu0 0
    %88 = vmatpush1.bf16.msra.mxu0 0
    %89 = vmatprep.mubr.bf16.mxu0 0
    %90 = vmatmul.mubr.bf16.gmra.mrb[0].mxu0 %v55
    %v91 = vpop.f32.mrb[0].mxu0
    %v92 = vadd.f32 0.0, %v91
    %v93 = vpop.f32.mrb[0].mxu0
    %v94 = vpop.f32.mrb[0].mxu0
    %v95 = vpop.f32.mrb[0].mxu0
    %96 = vdwg.mxu0
    %v97 = vadd.f32 %v31, %v92
    %s98 = scalar_lea.vmem %s1, 16
    %v99 = vld [vmem:[%s98] sm:$0xf]
    %v100 = vld [vmem:[%s98 + $0x4] sm:$0xf]
    %v101 = vld [vmem:[%s98 + $0x8] sm:$0xf]
    %v102 = vld [vmem:[%s98 + $0xc] sm:$0xf]
    %v107 = vunpack.c.l.b16 %v99
    %v108 = vunpack.c.l.b16 %v100
    %v109 = vunpack.c.l.b16 %v101
    %v110 = vunpack.c.l.b16 %v102
    %v111 = vpack.c.b16 %v108, %v107
    %v112 = vpack.c.b16 %v110, %v109
    %115 = vmatprep.subr.bf16.mxu0 0
    %116 = vmatpush1.bf16.msra.mxu0 %v111
    %117 = vmatprep.subr.bf16.mxu0 0
    %118 = vmatpush1.bf16.msra.mxu0 %v112
    %119 = vmatprep.subr.bf16.mxu0 0
    %120 = vmatpush1.bf16.msra.mxu0 0
    %121 = vmatprep.subr.bf16.mxu0 0
    %122 = vmatpush1.bf16.msra.mxu0 0
    %123 = vmatprep.subr.bf16.mxu0 0
    %124 = vmatpush1.bf16.msra.mxu0 0
    %125 = vmatprep.subr.bf16.mxu0 0
    %126 = vmatpush1.bf16.msra.mxu0 0
    %127 = vmatprep.subr.bf16.mxu0 0
    %128 = vmatpush1.bf16.msra.mxu0 0
    %129 = vmatprep.subr.bf16.mxu0 0
    %130 = vmatpush1.bf16.msra.mxu0 0
    %131 = vmatprep.subr.bf16.mxu0 0
    %132 = vmatpush1.bf16.msra.mxu0 0
    %133 = vmatprep.subr.bf16.mxu0 0
    %134 = vmatpush1.bf16.msra.mxu0 0
    %135 = vmatprep.subr.bf16.mxu0 0
    %136 = vmatpush1.bf16.msra.mxu0 0
    %137 = vmatprep.subr.bf16.mxu0 0
    %138 = vmatpush1.bf16.msra.mxu0 0
    %139 = vmatprep.subr.bf16.mxu0 0
    %140 = vmatpush1.bf16.msra.mxu0 0
    %141 = vmatprep.subr.bf16.mxu0 0
    %142 = vmatpush1.bf16.msra.mxu0 0
    %143 = vmatprep.subr.bf16.mxu0 0
    %144 = vmatpush1.bf16.msra.mxu0 0
    %145 = vmatprep.subr.bf16.mxu0 0
    %146 = vmatpush1.bf16.msra.mxu0 0
    %147 = vmatprep.mubr.bf16.mxu0 0
    %148 = vmatmul.mubr.bf16.gmra.mrb[0].mxu0 %v55
    %v149 = vpop.f32.mrb[0].mxu0
    %v150 = vadd.f32 0.0, %v149
    %v151 = vpop.f32.mrb[0].mxu0
    %v152 = vpop.f32.mrb[0].mxu0
    %v153 = vpop.f32.mrb[0].mxu0
    %154 = vdwg.mxu0
    %v155 = vadd.f32 %v32, %v150
    %s156 = scalar_lea.vmem %s1, 32
    %v157 = vld [vmem:[%s156] sm:$0xf]
    %v158 = vld [vmem:[%s156 + $0x4] sm:$0xf]
    %v159 = vld [vmem:[%s156 + $0x8] sm:$0xf]
    %v160 = vld [vmem:[%s156 + $0xc] sm:$0xf]
    %v165 = vunpack.c.l.b16 %v157
    %v166 = vunpack.c.l.b16 %v158
    %v167 = vunpack.c.l.b16 %v159
    %v168 = vunpack.c.l.b16 %v160
    %v169 = vpack.c.b16 %v166, %v165
    %v170 = vpack.c.b16 %v168, %v167
    %173 = vmatprep.subr.bf16.mxu0 0
    %174 = vmatpush1.bf16.msra.mxu0 %v169
    %175 = vmatprep.subr.bf16.mxu0 0
    %176 = vmatpush1.bf16.msra.mxu0 %v170
    %177 = vmatprep.subr.bf16.mxu0 0
    %178 = vmatpush1.bf16.msra.mxu0 0
    %179 = vmatprep.subr.bf16.mxu0 0
    %180 = vmatpush1.bf16.msra.mxu0 0
    %181 = vmatprep.subr.bf16.mxu0 0
    %182 = vmatpush1.bf16.msra.mxu0 0
    %183 = vmatprep.subr.bf16.mxu0 0
    %184 = vmatpush1.bf16.msra.mxu0 0
    %185 = vmatprep.subr.bf16.mxu0 0
    %186 = vmatpush1.bf16.msra.mxu0 0
    %187 = vmatprep.subr.bf16.mxu0 0
    %188 = vmatpush1.bf16.msra.mxu0 0
    %189 = vmatprep.subr.bf16.mxu0 0
    %190 = vmatpush1.bf16.msra.mxu0 0
    %191 = vmatprep.subr.bf16.mxu0 0
    %192 = vmatpush1.bf16.msra.mxu0 0
    %193 = vmatprep.subr.bf16.mxu0 0
    %194 = vmatpush1.bf16.msra.mxu0 0
    %195 = vmatprep.subr.bf16.mxu0 0
    %196 = vmatpush1.bf16.msra.mxu0 0
    %197 = vmatprep.subr.bf16.mxu0 0
    %198 = vmatpush1.bf16.msra.mxu0 0
    %199 = vmatprep.subr.bf16.mxu0 0
    %200 = vmatpush1.bf16.msra.mxu0 0
    %201 = vmatprep.subr.bf16.mxu0 0
    %202 = vmatpush1.bf16.msra.mxu0 0
    %203 = vmatprep.subr.bf16.mxu0 0
    %204 = vmatpush1.bf16.msra.mxu0 0
    %205 = vmatprep.mubr.bf16.mxu0 0
    %206 = vmatmul.mubr.bf16.gmra.mrb[0].mxu0 %v55
    %v207 = vpop.f32.mrb[0].mxu0
    %v208 = vadd.f32 0.0, %v207
    %v209 = vpop.f32.mrb[0].mxu0
    %v210 = vpop.f32.mrb[0].mxu0
    %v211 = vpop.f32.mrb[0].mxu0
    %212 = vdwg.mxu0
    %v213 = vadd.f32 %v33, %v208
    %s214 = scalar_lea.vmem %s1, 48
    %v215 = vld [vmem:[%s214] sm:$0xf]
    %v216 = vld [vmem:[%s214 + $0x4] sm:$0xf]
    %v217 = vld [vmem:[%s214 + $0x8] sm:$0xf]
    %v218 = vld [vmem:[%s214 + $0xc] sm:$0xf]
    %v223 = vunpack.c.l.b16 %v215
    %v224 = vunpack.c.l.b16 %v216
    %v225 = vunpack.c.l.b16 %v217
    %v226 = vunpack.c.l.b16 %v218
    %v227 = vpack.c.b16 %v224, %v223
    %v228 = vpack.c.b16 %v226, %v225
    %231 = vmatprep.subr.bf16.mxu0 0
    %232 = vmatpush1.bf16.msra.mxu0 %v227
    %233 = vmatprep.subr.bf16.mxu0 0
    %234 = vmatpush1.bf16.msra.mxu0 %v228
    %235 = vmatprep.subr.bf16.mxu0 0
    %236 = vmatpush1.bf16.msra.mxu0 0
    %237 = vmatprep.subr.bf16.mxu0 0
    %238 = vmatpush1.bf16.msra.mxu0 0
    %239 = vmatprep.subr.bf16.mxu0 0
    %240 = vmatpush1.bf16.msra.mxu0 0
    %241 = vmatprep.subr.bf16.mxu0 0
    %242 = vmatpush1.bf16.msra.mxu0 0
    %243 = vmatprep.subr.bf16.mxu0 0
    %244 = vmatpush1.bf16.msra.mxu0 0
    %245 = vmatprep.subr.bf16.mxu0 0
    %246 = vmatpush1.bf16.msra.mxu0 0
    %247 = vmatprep.subr.bf16.mxu0 0
    %248 = vmatpush1.bf16.msra.mxu0 0
    %249 = vmatprep.subr.bf16.mxu0 0
    %250 = vmatpush1.bf16.msra.mxu0 0
    %251 = vmatprep.subr.bf16.mxu0 0
    %252 = vmatpush1.bf16.msra.mxu0 0
    %253 = vmatprep.subr.bf16.mxu0 0
    %254 = vmatpush1.bf16.msra.mxu0 0
    %255 = vmatprep.subr.bf16.mxu0 0
    %256 = vmatpush1.bf16.msra.mxu0 0
    %257 = vmatprep.subr.bf16.mxu0 0
    %258 = vmatpush1.bf16.msra.mxu0 0
    %259 = vmatprep.subr.bf16.mxu0 0
    %260 = vmatpush1.bf16.msra.mxu0 0
    %261 = vmatprep.subr.bf16.mxu0 0
    %262 = vmatpush1.bf16.msra.mxu0 0
    %263 = vmatprep.mubr.bf16.mxu0 0
    %264 = vmatmul.mubr.bf16.gmra.mrb[0].mxu0 %v55
    %v265 = vpop.f32.mrb[0].mxu0
    %v266 = vadd.f32 0.0, %v265
    %v267 = vpop.f32.mrb[0].mxu0
    %v268 = vpop.f32.mrb[0].mxu0
    %v269 = vpop.f32.mrb[0].mxu0
    %270 = vdwg.mxu0
    %v271 = vadd.f32 %v34, %v266
    %v272 = vxor.u32 %v97, 2147483648
    %v273 = vmul.f32 %v272, 1.442695
    %v274 = vpow.pop %v273
    %v275 = vadd.f32 %v274, 1.0
    %v276 = vrcp.pop %v275
    %v277 = vmul.f32 1.0, %v276
    %v278 = vxor.u32 %v155, 2147483648
    %v279 = vmul.f32 %v278, 1.442695
    %v280 = vpow.pop %v279
    %v281 = vadd.f32 %v280, 1.0
    %v282 = vrcp.pop %v281
    %v283 = vmul.f32 1.0, %v282
    %v284 = vtanh.pop %v213
    %v285 = vxor.u32 %v271, 2147483648
    %v286 = vmul.f32 %v285, 1.442695
    %v287 = vpow.pop %v286
    %v288 = vadd.f32 %v287, 1.0
    %v289 = vrcp.pop %v288
    %v290 = vmul.f32 1.0, %v289
    %v291 = vmul.f32 %v283, %v36
    %v292 = vmul.f32 %v277, %v284
    %v293 = vadd.f32 %v291, %v292
    %v294 = vtanh.pop %v293
    %v295 = vmul.f32 %v290, %v294
    %296 = vst.msk [vmem:[#allocation3] sm:$0xff] %vm18, %v293
    %297 = vst.msk [vmem:[#allocation2] sm:$0xff] %vm18, %v295
    %s298 = scalar_lea.vmem [#allocation2], 8
    %v299 = vld [vmem:[%s298] sm:$0xff]
    %s300 = scalar_lea.vmem [#allocation3], 8
    %v301 = vld [vmem:[%s300] sm:$0xff]
    %303 = vrot.lane.b32.xlu0 %v299, 32
    %v304 = vpop.permute.xlu0 %303
    %v306 = vsel %vm18, %v295, %v304
    %v307 = vpack.c.bf16 %v306, %v306
    %v308 = vld [vmem:[%s3] sm:$0x1]
    %v309 = vld [vmem:[%s2] sm:$0xf]
    %v310 = vld [vmem:[%s2 + $0x4] sm:$0xf]
    %v311 = vld [vmem:[%s2 + $0x8] sm:$0xf]
    %v312 = vld [vmem:[%s2 + $0xc] sm:$0xf]
    %v313 = vld [vmem:[%s2 + $0x10] sm:$0xf]
    %v314 = vld [vmem:[%s2 + $0x14] sm:$0xf]
    %v315 = vld [vmem:[%s2 + $0x18] sm:$0xf]
    %v316 = vld [vmem:[%s2 + $0x1c] sm:$0xf]
    %v325 = vunpack.c.l.b16 %v309
    %v326 = vunpack.c.l.b16 %v310
    %v327 = vunpack.c.l.b16 %v311
    %v328 = vunpack.c.l.b16 %v312
    %v329 = vunpack.c.l.b16 %v313
    %v330 = vunpack.c.l.b16 %v314
    %v331 = vunpack.c.l.b16 %v315
    %v332 = vunpack.c.l.b16 %v316
    %v333 = vpack.c.b16 %v326, %v325
    %v334 = vpack.c.b16 %v328, %v327
    %v335 = vpack.c.b16 %v330, %v329
    %v336 = vpack.c.b16 %v332, %v331
    %vm341 = vcmask 523264
    %v343 = vsel %vm341, %v307, 0
    %345 = vmatprep.subr.bf16.mxu0 0
    %346 = vmatpush1.bf16.msra.mxu0 %v333
    %347 = vmatprep.subr.bf16.mxu0 0
    %348 = vmatpush1.bf16.msra.mxu0 %v334
    %349 = vmatprep.subr.bf16.mxu0 0
    %350 = vmatpush1.bf16.msra.mxu0 %v335
    %351 = vmatprep.subr.bf16.mxu0 0
    %352 = vmatpush1.bf16.msra.mxu0 %v336
    %353 = vmatprep.subr.bf16.mxu0 0
    %354 = vmatpush1.bf16.msra.mxu0 0
    %355 = vmatprep.subr.bf16.mxu0 0
    %356 = vmatpush1.bf16.msra.mxu0 0
    %357 = vmatprep.subr.bf16.mxu0 0
    %358 = vmatpush1.bf16.msra.mxu0 0
    %359 = vmatprep.subr.bf16.mxu0 0
    %360 = vmatpush1.bf16.msra.mxu0 0
    %361 = vmatprep.subr.bf16.mxu0 0
    %362 = vmatpush1.bf16.msra.mxu0 0
    %363 = vmatprep.subr.bf16.mxu0 0
    %364 = vmatpush1.bf16.msra.mxu0 0
    %365 = vmatprep.subr.bf16.mxu0 0
    %366 = vmatpush1.bf16.msra.mxu0 0
    %367 = vmatprep.subr.bf16.mxu0 0
    %368 = vmatpush1.bf16.msra.mxu0 0
    %369 = vmatprep.subr.bf16.mxu0 0
    %370 = vmatpush1.bf16.msra.mxu0 0
    %371 = vmatprep.subr.bf16.mxu0 0
    %372 = vmatpush1.bf16.msra.mxu0 0
    %373 = vmatprep.subr.bf16.mxu0 0
    %374 = vmatpush1.bf16.msra.mxu0 0
    %375 = vmatprep.subr.bf16.mxu0 0
    %376 = vmatpush1.bf16.msra.mxu0 0
    %377 = vmatprep.mubr.bf16.mxu0 0
    %378 = vmatmul.mubr.bf16.gmra.mrb[0].mxu0 %v343
    %v379 = vpop.f32.mrb[0].mxu0
    %v380 = vadd.f32 0.0, %v379
    %v381 = vpop.f32.mrb[0].mxu0
    %v382 = vpop.f32.mrb[0].mxu0
    %v383 = vpop.f32.mrb[0].mxu0
    %384 = vdwg.mxu0
    %v386 = vlaneseq
    %v387 = vshrl.u32 %v386, 7
    %v388 = vsub.s32 0, %v387
    %v389 = vrot.slane %v308, %v388
    %v391 = vadd.f32 %v389, %v380
    %s392 = scalar_lea.vmem %s3, 1
    %v393 = vld [vmem:[%s392] sm:$0x1]
    %s394 = scalar_lea.vmem %s2, 32
    %v395 = vld [vmem:[%s394] sm:$0xf]
    %v396 = vld [vmem:[%s394 + $0x4] sm:$0xf]
    %v397 = vld [vmem:[%s394 + $0x8] sm:$0xf]
    %v398 = vld [vmem:[%s394 + $0xc] sm:$0xf]
    %v399 = vld [vmem:[%s394 + $0x10] sm:$0xf]
    %v400 = vld [vmem:[%s394 + $0x14] sm:$0xf]
    %v401 = vld [vmem:[%s394 + $0x18] sm:$0xf]
    %v402 = vld [vmem:[%s394 + $0x1c] sm:$0xf]
    %v411 = vunpack.c.l.b16 %v395
    %v412 = vunpack.c.l.b16 %v396
    %v413 = vunpack.c.l.b16 %v397
    %v414 = vunpack.c.l.b16 %v398
    %v415 = vunpack.c.l.b16 %v399
    %v416 = vunpack.c.l.b16 %v400
    %v417 = vunpack.c.l.b16 %v401
    %v418 = vunpack.c.l.b16 %v402
    %v419 = vpack.c.b16 %v412, %v411
    %v420 = vpack.c.b16 %v414, %v413
    %v421 = vpack.c.b16 %v416, %v415
    %v422 = vpack.c.b16 %v418, %v417
    %427 = vmatprep.subr.bf16.mxu0 0
    %428 = vmatpush1.bf16.msra.mxu0 %v419
    %429 = vmatprep.subr.bf16.mxu0 0
    %430 = vmatpush1.bf16.msra.mxu0 %v420
    %431 = vmatprep.subr.bf16.mxu0 0
    %432 = vmatpush1.bf16.msra.mxu0 %v421
    %433 = vmatprep.subr.bf16.mxu0 0
    %434 = vmatpush1.bf16.msra.mxu0 %v422
    %435 = vmatprep.subr.bf16.mxu0 0
    %436 = vmatpush1.bf16.msra.mxu0 0
    %437 = vmatprep.subr.bf16.mxu0 0
    %438 = vmatpush1.bf16.msra.mxu0 0
    %439 = vmatprep.subr.bf16.mxu0 0
    %440 = vmatpush1.bf16.msra.mxu0 0
    %441 = vmatprep.subr.bf16.mxu0 0
    %442 = vmatpush1.bf16.msra.mxu0 0
    %443 = vmatprep.subr.bf16.mxu0 0
    %444 = vmatpush1.bf16.msra.mxu0 0
    %445 = vmatprep.subr.bf16.mxu0 0
    %446 = vmatpush1.bf16.msra.mxu0 0
    %447 = vmatprep.subr.bf16.mxu0 0
    %448 = vmatpush1.bf16.msra.mxu0 0
    %449 = vmatprep.subr.bf16.mxu0 0
    %450 = vmatpush1.bf16.msra.mxu0 0
    %451 = vmatprep.subr.bf16.mxu0 0
    %452 = vmatpush1.bf16.msra.mxu0 0
    %453 = vmatprep.subr.bf16.mxu0 0
    %454 = vmatpush1.bf16.msra.mxu0 0
    %455 = vmatprep.subr.bf16.mxu0 0
    %456 = vmatpush1.bf16.msra.mxu0 0
    %457 = vmatprep.subr.bf16.mxu0 0
    %458 = vmatpush1.bf16.msra.mxu0 0
    %459 = vmatprep.mubr.bf16.mxu0 0
    %460 = vmatmul.mubr.bf16.gmra.mrb[0].mxu0 %v343
    %v461 = vpop.f32.mrb[0].mxu0
    %v462 = vadd.f32 0.0, %v461
    %v463 = vpop.f32.mrb[0].mxu0
    %v464 = vpop.f32.mrb[0].mxu0
    %v465 = vpop.f32.mrb[0].mxu0
    %466 = vdwg.mxu0
    %v468 = vlaneseq
    %v469 = vshrl.u32 %v468, 7
    %v470 = vsub.s32 0, %v469
    %v471 = vrot.slane %v393, %v470
    %v473 = vadd.f32 %v471, %v462
    %s474 = scalar_lea.vmem %s3, 2
    %v475 = vld [vmem:[%s474] sm:$0x1]
    %s476 = scalar_lea.vmem %s2, 64
    %v477 = vld [vmem:[%s476] sm:$0xf]
    %v478 = vld [vmem:[%s476 + $0x4] sm:$0xf]
    %v479 = vld [vmem:[%s476 + $0x8] sm:$0xf]
    %v480 = vld [vmem:[%s476 + $0xc] sm:$0xf]
    %v481 = vld [vmem:[%s476 + $0x10] sm:$0xf]
    %v482 = vld [vmem:[%s476 + $0x14] sm:$0xf]
    %v483 = vld [vmem:[%s476 + $0x18] sm:$0xf]
    %v484 = vld [vmem:[%s476 + $0x1c] sm:$0xf]
    %v493 = vunpack.c.l.b16 %v477
    %v494 = vunpack.c.l.b16 %v478
    %v495 = vunpack.c.l.b16 %v479
    %v496 = vunpack.c.l.b16 %v480
    %v497 = vunpack.c.l.b16 %v481
    %v498 = vunpack.c.l.b16 %v482
    %v499 = vunpack.c.l.b16 %v483
    %v500 = vunpack.c.l.b16 %v484
    %v501 = vpack.c.b16 %v494, %v493
    %v502 = vpack.c.b16 %v496, %v495
    %v503 = vpack.c.b16 %v498, %v497
    %v504 = vpack.c.b16 %v500, %v499
    %509 = vmatprep.subr.bf16.mxu0 0
    %510 = vmatpush1.bf16.msra.mxu0 %v501
    %511 = vmatprep.subr.bf16.mxu0 0
    %512 = vmatpush1.bf16.msra.mxu0 %v502
    %513 = vmatprep.subr.bf16.mxu0 0
    %514 = vmatpush1.bf16.msra.mxu0 %v503
    %515 = vmatprep.subr.bf16.mxu0 0
    %516 = vmatpush1.bf16.msra.mxu0 %v504
    %517 = vmatprep.subr.bf16.mxu0 0
    %518 = vmatpush1.bf16.msra.mxu0 0
    %519 = vmatprep.subr.bf16.mxu0 0
    %520 = vmatpush1.bf16.msra.mxu0 0
    %521 = vmatprep.subr.bf16.mxu0 0
    %522 = vmatpush1.bf16.msra.mxu0 0
    %523 = vmatprep.subr.bf16.mxu0 0
    %524 = vmatpush1.bf16.msra.mxu0 0
    %525 = vmatprep.subr.bf16.mxu0 0
    %526 = vmatpush1.bf16.msra.mxu0 0
    %527 = vmatprep.subr.bf16.mxu0 0
    %528 = vmatpush1.bf16.msra.mxu0 0
    %529 = vmatprep.subr.bf16.mxu0 0
    %530 = vmatpush1.bf16.msra.mxu0 0
    %531 = vmatprep.subr.bf16.mxu0 0
    %532 = vmatpush1.bf16.msra.mxu0 0
    %533 = vmatprep.subr.bf16.mxu0 0
    %534 = vmatpush1.bf16.msra.mxu0 0
    %535 = vmatprep.subr.bf16.mxu0 0
    %536 = vmatpush1.bf16.msra.mxu0 0
    %537 = vmatprep.subr.bf16.mxu0 0
    %538 = vmatpush1.bf16.msra.mxu0 0
    %539 = vmatprep.subr.bf16.mxu0 0
    %540 = vmatpush1.bf16.msra.mxu0 0
    %541 = vmatprep.mubr.bf16.mxu0 0
    %542 = vmatmul.mubr.bf16.gmra.mrb[0].mxu0 %v343
    %v543 = vpop.f32.mrb[0].mxu0
    %v544 = vadd.f32 0.0, %v543
    %v545 = vpop.f32.mrb[0].mxu0
    %v546 = vpop.f32.mrb[0].mxu0
    %v547 = vpop.f32.mrb[0].mxu0
    %548 = vdwg.mxu0
    %v550 = vlaneseq
    %v551 = vshrl.u32 %v550, 7
    %v552 = vsub.s32 0, %v551
    %v553 = vrot.slane %v475, %v552
    %v555 = vadd.f32 %v553, %v544
    %s556 = scalar_lea.vmem %s3, 3
    %v557 = vld [vmem:[%s556] sm:$0x1]
    %s558 = scalar_lea.vmem %s2, 96
    %v559 = vld [vmem:[%s558] sm:$0xf]
    %v560 = vld [vmem:[%s558 + $0x4] sm:$0xf]
    %v561 = vld [vmem:[%s558 + $0x8] sm:$0xf]
    %v562 = vld [vmem:[%s558 + $0xc] sm:$0xf]
    %v563 = vld [vmem:[%s558 + $0x10] sm:$0xf]
    %v564 = vld [vmem:[%s558 + $0x14] sm:$0xf]
    %v565 = vld [vmem:[%s558 + $0x18] sm:$0xf]
    %v566 = vld [vmem:[%s558 + $0x1c] sm:$0xf]
    %v575 = vunpack.c.l.b16 %v559
    %v576 = vunpack.c.l.b16 %v560
    %v577 = vunpack.c.l.b16 %v561
    %v578 = vunpack.c.l.b16 %v562
    %v579 = vunpack.c.l.b16 %v563
    %v580 = vunpack.c.l.b16 %v564
    %v581 = vunpack.c.l.b16 %v565
    %v582 = vunpack.c.l.b16 %v566
    %v583 = vpack.c.b16 %v576, %v575
    %v584 = vpack.c.b16 %v578, %v577
    %v585 = vpack.c.b16 %v580, %v579
    %v586 = vpack.c.b16 %v582, %v581
    %591 = vmatprep.subr.bf16.mxu0 0
    %592 = vmatpush1.bf16.msra.mxu0 %v583
    %593 = vmatprep.subr.bf16.mxu0 0
    %594 = vmatpush1.bf16.msra.mxu0 %v584
    %595 = vmatprep.subr.bf16.mxu0 0
    %596 = vmatpush1.bf16.msra.mxu0 %v585
    %597 = vmatprep.subr.bf16.mxu0 0
    %598 = vmatpush1.bf16.msra.mxu0 %v586
    %599 = vmatprep.subr.bf16.mxu0 0
    %600 = vmatpush1.bf16.msra.mxu0 0
    %601 = vmatprep.subr.bf16.mxu0 0
    %602 = vmatpush1.bf16.msra.mxu0 0
    %603 = vmatprep.subr.bf16.mxu0 0
    %604 = vmatpush1.bf16.msra.mxu0 0
    %605 = vmatprep.subr.bf16.mxu0 0
    %606 = vmatpush1.bf16.msra.mxu0 0
    %607 = vmatprep.subr.bf16.mxu0 0
    %608 = vmatpush1.bf16.msra.mxu0 0
    %609 = vmatprep.subr.bf16.mxu0 0
    %610 = vmatpush1.bf16.msra.mxu0 0
    %611 = vmatprep.subr.bf16.mxu0 0
    %612 = vmatpush1.bf16.msra.mxu0 0
    %613 = vmatprep.subr.bf16.mxu0 0
    %614 = vmatpush1.bf16.msra.mxu0 0
    %615 = vmatprep.subr.bf16.mxu0 0
    %616 = vmatpush1.bf16.msra.mxu0 0
    %617 = vmatprep.subr.bf16.mxu0 0
    %618 = vmatpush1.bf16.msra.mxu0 0
    %619 = vmatprep.subr.bf16.mxu0 0
    %620 = vmatpush1.bf16.msra.mxu0 0
    %621 = vmatprep.subr.bf16.mxu0 0
    %622 = vmatpush1.bf16.msra.mxu0 0
    %623 = vmatprep.mubr.bf16.mxu0 0
    %624 = vmatmul.mubr.bf16.gmra.mrb[0].mxu0 %v343
    %v625 = vpop.f32.mrb[0].mxu0
    %v626 = vadd.f32 0.0, %v625
    %v627 = vpop.f32.mrb[0].mxu0
    %v628 = vpop.f32.mrb[0].mxu0
    %v629 = vpop.f32.mrb[0].mxu0
    %630 = vdwg.mxu0
    %v632 = vlaneseq
    %v633 = vshrl.u32 %v632, 7
    %v634 = vsub.s32 0, %v633
    %v635 = vrot.slane %v557, %v634
    %v637 = vadd.f32 %v635, %v626
    %v638 = vxor.u32 %v391, 2147483648
    %v639 = vmul.f32 %v638, 1.442695
    %v640 = vpow.pop %v639
    %v641 = vadd.f32 %v640, 1.0
    %v642 = vrcp.pop %v641
    %v643 = vmul.f32 1.0, %v642
    %v644 = vxor.u32 %v473, 2147483648
    %v645 = vmul.f32 %v644, 1.442695
    %v646 = vpow.pop %v645
    %v647 = vadd.f32 %v646, 1.0
    %v648 = vrcp.pop %v647
    %v649 = vmul.f32 1.0, %v648
    %v650 = vtanh.pop %v555
    %v651 = vxor.u32 %v637, 2147483648
    %v652 = vmul.f32 %v651, 1.442695
    %v653 = vpow.pop %v652
    %v654 = vadd.f32 %v653, 1.0
    %v655 = vrcp.pop %v654
    %v656 = vmul.f32 1.0, %v655
    %v657 = vmul.f32 %v649, %v301
    %v658 = vmul.f32 %v643, %v650
    %v659 = vadd.f32 %v657, %v658
    %v660 = vtanh.pop %v659
    %v661 = vmul.f32 %v656, %v660
    %662 = vst.msk [vmem:[%s300] sm:$0xff] %vm18, %v659
    %663 = vst.msk [vmem:[%s298] sm:$0xff] %vm18, %v661
    %s664 = smul.u32 %s24, 8
    %s665 = scalar_lea.vmem %s4, %s664
    %666 = vst.msk [vmem:[%s665] sm:$0xff] %vm18, %v661
  $region22: #{forward.2} parent=0 // loop_footer
    %s28 = sadd.s32 1, %s24
  $region23: #{forward.2} parent=0 // loop_footer_branch
    %23 = sbr.rel target = $region19
  $region24: #{forward.2} parent=0 // loop_exit
    _
  // Predicated region
  $region25: #{forward.2} parent=0 // pred_check
    _
  $region26: #{forward.2} parent=0 // pred_check_branch
    %668 = sbr.rel (0) target = $region28
  $region27: #{forward.2} parent=0 // pred_region
    _
  $region28: #{forward.2} parent=0 // pred_fallthru
    _
  // Predicated region
  $region29: #{forward.2} parent=0 // pred_check
    _
  $region30: #{forward.2} parent=0 // pred_check_branch
    %670 = sbr.rel (0) target = $region32
  $region31: #{forward.2} parent=0 // pred_region
    _
  $region32: #{forward.2} parent=0 // pred_fallthru
    _

</llo_original>
